<compile_context>
chip_gen: v7x
topology: tpu7x:2x2x1
jax: 0.10.0
libtpu: 0.0.40
codegen_flags: <defaults>
</compile_context>

<pallas_src>
import functools

import jax
import jax.numpy as jnp
from jax.experimental import pallas as pl
from jax.experimental.pallas import tpu as pltpu


def _round_up(x, m):
    return ((x + m - 1) // m) * m


def sms_classifier_kernel(tok_ref, w_ref, b_ref, out_ref, *, seq_unroll):
    # tok_ref: (TB, L) int32 ; w_ref: (Vp, Cp) [already scaled by 1/L] ;
    # b_ref: (1, Cp) f32 ; out_ref: (TB, Cp) f32
    tok = tok_ref[...]                                            # (TB, L)
    TB, L = tok.shape
    Vp = w_ref.shape[0]

    # Per-sequence vocab counts via (TB, Vp) VPU compare+adds.  The iota is
    # hoisted out of the loop (JAX does not CSE broadcast_in_dim).
    vocab_iota = jax.lax.broadcasted_iota(jnp.int32, (TB, Vp), 1)

    if L <= 32:
        # Short SMS sequences: fully unrolled static loop (best LLO visibility).
        counts = jnp.zeros((TB, Vp), jnp.float32)
        for l in range(L):
            counts = counts + (tok[:, l:l + 1] == vocab_iota).astype(jnp.float32)
    else:
        # Long sequences: moderately unrolled fori_loop bounds live ranges.
        def body(l, counts):
            col = jax.lax.dynamic_slice(tok, (0, l), (TB, 1))     # (TB, 1)
            return counts + (col == vocab_iota).astype(jnp.float32)

        counts = jax.lax.fori_loop(0, L, body,
                                   jnp.zeros((TB, Vp), jnp.float32),
                                   unroll=seq_unroll)

    # Single MXU matmul against the folded (embedding @ fc / L) table.  Counts
    # are exact small integers, so the cast to bf16/f32 is exact for L <= 256.
    acc = jnp.dot(counts.astype(w_ref.dtype), w_ref[...],
                  preferred_element_type=jnp.float32)             # (TB, Cp)
    out_ref[...] = (acc + b_ref[...]).astype(out_ref.dtype)


def fold_sms_params(emb_table, fc_weight, fc_bias, seq_len, *,
                    matmul_dtype=jnp.bfloat16):
    """Precompute the folded, lane-dense-padded parameters ONCE per weight update.

    emb_table: (V, E); fc_weight: (E, C) [= nn.Linear.weight.T]; fc_bias: (C,).
    Returns (w_pad, b_pad) where w_pad = pad((emb_table @ fc_weight) / seq_len)
    in `matmul_dtype` (shape (Vp, Cp)) and b_pad = pad(bias) in f32 (shape (1, Cp)).
    """
    V, E = emb_table.shape
    C = fc_weight.shape[1]
    Vp = _round_up(V, 128)
    Cp = _round_up(C, 128)

    w_eff = jnp.dot(emb_table.astype(jnp.float32), fc_weight.astype(jnp.float32),
                    preferred_element_type=jnp.float32) * (1.0 / seq_len)  # (V, C)
    w_pad = jnp.pad(w_eff, ((0, Vp - V), (0, Cp - C))).astype(matmul_dtype)
    b_pad = jnp.pad(fc_bias.reshape(1, C).astype(jnp.float32),
                    ((0, 0), (0, Cp - C)))
    return w_pad, b_pad


def sms_classifier_packed(tokens, w_pad, b_pad, num_classes, *,
                          batch_block=None, seq_unroll=8):
    """tokens: (B, L) int32; w_pad/b_pad from fold_sms_params().
    Returns (B, num_classes) float32 logits."""
    B, L = tokens.shape
    Vp, Cp = w_pad.shape

    if batch_block is None:
        # Fill the MXU M dim (128 rows) for large batches without over-padding
        # tiny ones; B > batch_block also gives >= 2 parallel steps (v7x megacore).
        batch_block = min(128, _round_up(B, 8))
    batch_block = _round_up(batch_block, 8)
    Bp = _round_up(B, batch_block)

    tok_pad = jnp.pad(tokens.astype(jnp.int32), ((0, Bp - B), (0, 0)))
    grid = (Bp // batch_block,)
    kernel = functools.partial(sms_classifier_kernel, seq_unroll=seq_unroll)

    out = pl.pallas_call(
        kernel,
        out_shape=jax.ShapeDtypeStruct((Bp, Cp), jnp.float32),
        grid_spec=pltpu.PrefetchScalarGridSpec(
            num_scalar_prefetch=0,
            grid=grid,
            in_specs=[
                # Tokens: per-batch-block tile (last dim == full L, so no lane pad needed).
                pl.BlockSpec((batch_block, L), lambda i: (i, 0)),
                # Folded weights + bias are grid-invariant -> single-buffered.
                pl.BlockSpec((Vp, Cp), lambda i: (0, 0),
                             pipeline_mode=pl.Buffered(1)),
                pl.BlockSpec((1, Cp), lambda i: (0, 0),
                             pipeline_mode=pl.Buffered(1)),
            ],
            out_specs=pl.BlockSpec((batch_block, Cp), lambda i: (i, 0)),
        ),
        compiler_params=pltpu.CompilerParams(
            dimension_semantics=("parallel",)),
    )(tok_pad, w_pad, b_pad)

    return out[:B, :num_classes]


def sms_classifier(tokens, emb_table, fc_weight, fc_bias, *,
                   batch_block=None, matmul_dtype=jnp.bfloat16, seq_unroll=8):
    """One-shot convenience wrapper (fold + call).  For repeated inference reuse,
    call fold_sms_params() once and sms_classifier_packed() per batch."""
    L = tokens.shape[1]
    C = fc_weight.shape[1]
    w_pad, b_pad = fold_sms_params(emb_table, fc_weight, fc_bias, L,
                                   matmul_dtype=matmul_dtype)
    return sms_classifier_packed(tokens, w_pad, b_pad, C,
                                 batch_block=batch_block, seq_unroll=seq_unroll)


if __name__ == "__main__":
    # Small, forward-consistent shapes
    B, L = 2, 8            # batch, sequence length
    V, E, C = 32, 32, 8    # vocab_size, embed_dim, num_classes

    key = jax.random.PRNGKey(0)
    k_tok, k_emb, k_w, k_b = jax.random.split(key, 4)

    tokens = jax.random.randint(k_tok, (B, L), 0, V, dtype=jnp.int32)

    # Deterministic parameter init (shapes per nn.Embedding / nn.Linear)
    emb_table = jax.random.normal(k_emb, (V, E), dtype=jnp.float32)          # Embedding.weight
    bound = 1.0 / (E ** 0.5)
    fc_weight = jax.random.uniform(k_w, (E, C), jnp.float32, -bound, bound)  # Linear.weight.T
    fc_bias = jax.random.uniform(k_b, (C,), jnp.float32, -bound, bound)      # Linear.bias

    # Reference in plain JAX (same math as the PyTorch forward).
    ref = jnp.take(emb_table, tokens, axis=0).mean(axis=1) @ fc_weight + fc_bias

    # Exact path: f32 folded table, tight tolerance.
    w32, b32 = fold_sms_params(emb_table, fc_weight, fc_bias, L,
                               matmul_dtype=jnp.float32)
    out32 = jax.block_until_ready(sms_classifier_packed(tokens, w32, b32, C))
    assert out32.shape == (B, C)
    assert jnp.allclose(out32, ref, atol=1e-4), "f32 mismatch vs reference"

    # Default (bf16 folded table) path: only the table is bf16-rounded, counts exact.
    wbf, bbf = fold_sms_params(emb_table, fc_weight, fc_bias, L)
    outbf = jax.block_until_ready(sms_classifier_packed(tokens, wbf, bbf, C))
    assert outbf.shape == (B, C)
    assert jnp.allclose(outbf, ref, atol=2e-2, rtol=2e-2), "bf16 mismatch vs reference"

    print("KERNEL_OK")
</pallas_src>

<mosaic_0001>
module attributes {stable_mosaic.version = 11 : i64} {
  func.func @sms_classifier_kernel(%arg0: i32, %arg1: memref<8x8xi32, #tpu.memory_space<vmem>>, %arg2: memref<128x128xf32, #tpu.memory_space<vmem>>, %arg3: memref<1x128xf32, #tpu.memory_space<vmem>>, %arg4: memref<8x128xf32, #tpu.memory_space<vmem>>) attributes {dimension_semantics = [#tpu.dimension_semantics<parallel>], iteration_bounds = array<i64: 1>, scalar_prefetch = 0 : i64, scratch_operands = 0 : i64, tpu.core_type = #tpu.core_type<tc>, window_params = [{transform_indices = @transform_0, window_bounds = array<i64: 8, 8>}, {pipeline_mode = #tpu.pipeline_mode<synchronous>, transform_indices = @transform_1, window_bounds = array<i64: 128, 128>}, {pipeline_mode = #tpu.pipeline_mode<synchronous>, transform_indices = @transform_2, window_bounds = array<i64: 1, 128>}, {transform_indices = @transform_3, window_bounds = array<i64: 8, 128>}]} {
    %c0 = arith.constant 0 : index
    %c0_0 = arith.constant 0 : index
    %0 = vector.load %arg1[%c0, %c0_0] : memref<8x8xi32, #tpu.memory_space<vmem>>, vector<8x8xi32>
    %1 = tpu.iota {dimensions = array<i32: 1>} : vector<8x128xi32>
    %cst = arith.constant 0.000000e+00 : f32
    %2 = vector.broadcast %cst : f32 to vector<8x128xf32>
    %3 = vector.extract_strided_slice %0 {offsets = [0, 0], sizes = [8, 1], strides = [1, 1]} : vector<8x8xi32> to vector<8x1xi32>
    %4 = vector.broadcast %3 : vector<8x1xi32> to vector<8x128xi32>
    %5 = arith.cmpi eq, %4, %1 : vector<8x128xi32>
    %6 = arith.extui %5 : vector<8x128xi1> to vector<8x128xi32>
    %7 = arith.sitofp %6 : vector<8x128xi32> to vector<8x128xf32>
    %8 = arith.addf %2, %7 : vector<8x128xf32>
    %9 = vector.extract_strided_slice %0 {offsets = [0, 1], sizes = [8, 1], strides = [1, 1]} : vector<8x8xi32> to vector<8x1xi32>
    %10 = vector.broadcast %9 : vector<8x1xi32> to vector<8x128xi32>
    %11 = arith.cmpi eq, %10, %1 : vector<8x128xi32>
    %12 = arith.extui %11 : vector<8x128xi1> to vector<8x128xi32>
    %13 = arith.sitofp %12 : vector<8x128xi32> to vector<8x128xf32>
    %14 = arith.addf %8, %13 : vector<8x128xf32>
    %15 = vector.extract_strided_slice %0 {offsets = [0, 2], sizes = [8, 1], strides = [1, 1]} : vector<8x8xi32> to vector<8x1xi32>
    %16 = vector.broadcast %15 : vector<8x1xi32> to vector<8x128xi32>
    %17 = arith.cmpi eq, %16, %1 : vector<8x128xi32>
    %18 = arith.extui %17 : vector<8x128xi1> to vector<8x128xi32>
    %19 = arith.sitofp %18 : vector<8x128xi32> to vector<8x128xf32>
    %20 = arith.addf %14, %19 : vector<8x128xf32>
    %21 = vector.extract_strided_slice %0 {offsets = [0, 3], sizes = [8, 1], strides = [1, 1]} : vector<8x8xi32> to vector<8x1xi32>
    %22 = vector.broadcast %21 : vector<8x1xi32> to vector<8x128xi32>
    %23 = arith.cmpi eq, %22, %1 : vector<8x128xi32>
    %24 = arith.extui %23 : vector<8x128xi1> to vector<8x128xi32>
    %25 = arith.sitofp %24 : vector<8x128xi32> to vector<8x128xf32>
    %26 = arith.addf %20, %25 : vector<8x128xf32>
    %27 = vector.extract_strided_slice %0 {offsets = [0, 4], sizes = [8, 1], strides = [1, 1]} : vector<8x8xi32> to vector<8x1xi32>
    %28 = vector.broadcast %27 : vector<8x1xi32> to vector<8x128xi32>
    %29 = arith.cmpi eq, %28, %1 : vector<8x128xi32>
    %30 = arith.extui %29 : vector<8x128xi1> to vector<8x128xi32>
    %31 = arith.sitofp %30 : vector<8x128xi32> to vector<8x128xf32>
    %32 = arith.addf %26, %31 : vector<8x128xf32>
    %33 = vector.extract_strided_slice %0 {offsets = [0, 5], sizes = [8, 1], strides = [1, 1]} : vector<8x8xi32> to vector<8x1xi32>
    %34 = vector.broadcast %33 : vector<8x1xi32> to vector<8x128xi32>
    %35 = arith.cmpi eq, %34, %1 : vector<8x128xi32>
    %36 = arith.extui %35 : vector<8x128xi1> to vector<8x128xi32>
    %37 = arith.sitofp %36 : vector<8x128xi32> to vector<8x128xf32>
    %38 = arith.addf %32, %37 : vector<8x128xf32>
    %39 = vector.extract_strided_slice %0 {offsets = [0, 6], sizes = [8, 1], strides = [1, 1]} : vector<8x8xi32> to vector<8x1xi32>
    %40 = vector.broadcast %39 : vector<8x1xi32> to vector<8x128xi32>
    %41 = arith.cmpi eq, %40, %1 : vector<8x128xi32>
    %42 = arith.extui %41 : vector<8x128xi1> to vector<8x128xi32>
    %43 = arith.sitofp %42 : vector<8x128xi32> to vector<8x128xf32>
    %44 = arith.addf %38, %43 : vector<8x128xf32>
    %45 = vector.extract_strided_slice %0 {offsets = [0, 7], sizes = [8, 1], strides = [1, 1]} : vector<8x8xi32> to vector<8x1xi32>
    %46 = vector.broadcast %45 : vector<8x1xi32> to vector<8x128xi32>
    %47 = arith.cmpi eq, %46, %1 : vector<8x128xi32>
    %48 = arith.extui %47 : vector<8x128xi1> to vector<8x128xi32>
    %49 = arith.sitofp %48 : vector<8x128xi32> to vector<8x128xf32>
    %50 = arith.addf %44, %49 : vector<8x128xf32>
    %c0_1 = arith.constant 0 : index
    %c0_2 = arith.constant 0 : index
    %51 = vector.load %arg2[%c0_1, %c0_2] : memref<128x128xf32, #tpu.memory_space<vmem>>, vector<128x128xf32>
    %cst_3 = arith.constant dense<0.000000e+00> : vector<8x128xf32>
    %52 = tpu.matmul %50, %51, %cst_3 {dimension_numbers = #tpu.dot_dimension_numbers<[1], [0], [0], [1], [0, 0, 1, 1], [], []>} : vector<8x128xf32>, vector<128x128xf32>, vector<8x128xf32> -> vector<8x128xf32>
    %c0_4 = arith.constant 0 : index
    %c0_5 = arith.constant 0 : index
    %53 = vector.load %arg3[%c0_4, %c0_5] : memref<1x128xf32, #tpu.memory_space<vmem>>, vector<1x128xf32>
    %54 = vector.broadcast %53 : vector<1x128xf32> to vector<8x128xf32>
    %55 = arith.addf %52, %54 : vector<8x128xf32>
    %c0_6 = arith.constant 0 : index
    %c0_7 = arith.constant 0 : index
    %56 = vector.load %arg4[%c0_6, %c0_7] : memref<8x128xf32, #tpu.memory_space<vmem>>, vector<8x128xf32>
    tpu.vector_store %arg4[%c0_6, %c0_7], %55 {strides = array<i32>} : memref<8x128xf32, #tpu.memory_space<vmem>>, vector<8x128xf32>,
    return
  }
  func.func @transform_0(%arg0: i32) -> (i32, i32) {
    %c0_i32 = arith.constant 0 : i32
    %c0_i32_0 = arith.constant 0 : i32
    return %arg0, %c0_i32 : i32, i32
  }
  func.func @transform_1(%arg0: i32) -> (i32, i32) {
    %c0_i32 = arith.constant 0 : i32
    %c0_i32_0 = arith.constant 0 : i32
    %c0_i32_1 = arith.constant 0 : i32
    return %c0_i32, %c0_i32_0 : i32, i32
  }
  func.func @transform_2(%arg0: i32) -> (i32, i32) {
    %c0_i32 = arith.constant 0 : i32
    %c0_i32_0 = arith.constant 0 : i32
    %c0_i32_1 = arith.constant 0 : i32
    return %c0_i32, %c0_i32_0 : i32, i32
  }
  func.func @transform_3(%arg0: i32) -> (i32, i32) {
    %c0_i32 = arith.constant 0 : i32
    %c0_i32_0 = arith.constant 0 : i32
    return %arg0, %c0_i32 : i32, i32
  }
}

</mosaic_0001>

<llo_original>
// kernel: tpu_custom_call.1
$region0: #{tpu_custom_call.1}
  #allocation0 [shape = 'u32[]', space=smem, size = 0x4, offset = 0x4, fixed_abs, tag = 'smem constant byte address 0x4 - core index']
  #allocation1 [shape = 'u32[144,128]{1,0:T(1,128)}', space=vmem, size = 0x12000, scoped, tag = 'internal scratch']
  %s0 = inlined_call_operand.hbm [shape: s32[8,8], index: 0, kind: input, shape index: {}]
  %s1 = inlined_call_operand.hbm [shape: f32[128,128], index: 1, kind: input, shape index: {}]
  %s2 = inlined_call_operand.vmem [shape: f32[1,128], index: 2, kind: input, shape index: {}]
  %s3 = inlined_call_operand.hbm [shape: f32[8,128], index: 3, kind: output, shape index: {}]
  %s4 = sld [smem:[#allocation0]]
  $region30: #{tpu_custom_call.1} parent=0
    _
  %s6 = ssub.s32 1, %s4
  %s7 = scalar_select 0, %s6, %s4
  $region1: #{tpu_custom_call.1} parent=0
    #allocation2 [shape = 'u8[4096]{0}', space=vmem, size = 0x1000, scoped, tag = 'input window, operand 0, single buffered']
    #allocation3 [shape = 's32[1]{0}', space=sflag, size = 0x4, scoped, tag = 'scoped memory for tpu_custom_call.1']
    #allocation4 [shape = 's32[1]{0}', space=sflag, size = 0x4, scoped, tag = 'scoped memory for tpu_custom_call.1']
    #allocation5 [shape = 'u8[65536]{0}', space=vmem, size = 0x10000, scoped, tag = 'input window, operand 1, single buffered']
    #allocation6 [shape = 's32[1]{0}', space=sflag, size = 0x4, scoped, tag = 'scoped memory for tpu_custom_call.1']
    #allocation7 [shape = 'u8[4096]{0}', space=vmem, size = 0x1000, scoped, tag = 'output window, operand 0, single buffered']
    %8 = vsyncpa [#allocation3], 0
    %9 = vsyncpa [#allocation6], 0
    %10 = vsyncpa [#allocation4], 0
    // Predicated region
    $region2: #{tpu_custom_call.1} parent=1 // pred_check
      _
    $region3: #{tpu_custom_call.1} parent=1 // pred_check_branch
      %12 = sbr.rel (0) target = $region5
    $region4: #{tpu_custom_call.1} parent=1 // pred_region
      %s14 = ssub.s32 128, 128
      %15 = vsyncadd [#allocation3], %s14
      %s17 = sshll.u32 [#allocation2], 4
      %s18 = int_to_ptr.vmem [resolvable:$true] %s17
      %20 = dma.hbm_to_vmem [thread:$0]  %s0, 128, %s18, [#allocation3]
    $region5: #{tpu_custom_call.1} parent=1 // pred_fallthru
      _
    // Predicated region
    $region6: #{tpu_custom_call.1} parent=1 // pred_check
      _
    $region7: #{tpu_custom_call.1} parent=1 // pred_check_branch
      %22 = sbr.rel (0) target = $region9
    $region8: #{tpu_custom_call.1} parent=1 // pred_region
      %s24 = ssub.s32 2048, 2048
      %25 = vsyncadd [#allocation6], %s24
      %s26 = sshll.u32 [#allocation5], 4
      %s27 = int_to_ptr.vmem [resolvable:$true] %s26
      %32 = dma.hbm_to_vmem [thread:$0]  %s1, 2048, %s27, [#allocation6], 128, 128, 8
    $region9: #{tpu_custom_call.1} parent=1 // pred_fallthru
      _
    // Predicated region
    $region10: #{tpu_custom_call.1} parent=1 // pred_check
      _
    $region11: #{tpu_custom_call.1} parent=1 // pred_check_branch
      %34 = sbr.rel (0) target = $region13
    $region12: #{tpu_custom_call.1} parent=1 // pred_region
      _
    $region13: #{tpu_custom_call.1} parent=1 // pred_fallthru
      _
    // Predicated region
    $region14: #{tpu_custom_call.1} parent=1 // pred_check
      _
    $region15: #{tpu_custom_call.1} parent=1 // pred_check_branch
      %36 = sbr.rel (0) target = $region17
    $region16: #{tpu_custom_call.1} parent=1 // pred_region
      %37 = dma.done [#allocation3], 128
    $region17: #{tpu_custom_call.1} parent=1 // pred_fallthru
      _
    // Predicated region
    $region18: #{tpu_custom_call.1} parent=1 // pred_check
      _
    $region19: #{tpu_custom_call.1} parent=1 // pred_check_branch
      %39 = sbr.rel (0) target = $region21
    $region20: #{tpu_custom_call.1} parent=1 // pred_region
      %40 = dma.done [#allocation6], 2048
    $region21: #{tpu_custom_call.1} parent=1 // pred_fallthru
      _
    %v41 = vld [vmem:[#allocation2] sm:$0xff]
    %v42 = vlaneseq
    %v43 = vand.u32 %v42, 127
    %44 = vset.pattern.permute.xlu0 0
    %45 = vperm.xlu0 %44, %v41
    %v46 = vpop.permute.xlu0 %45
    %vm47 = vcmp.eq.s32.totalorder %v46, %v43
    %v48 = vsel %vm47, 1, 0
    %v49 = vcvt.s32.f32 %v48
    %v50 = vadd.f32 %v49, 0.0
    %51 = vset.pattern.permute.xlu0 1
    %52 = vperm.xlu0 %51, %v41
    %v53 = vpop.permute.xlu0 %52
    %vm54 = vcmp.eq.s32.totalorder %v53, %v43
    %v55 = vsel %vm54, 1, 0
    %v56 = vcvt.s32.f32 %v55
    %v57 = vadd.f32 %v50, %v56
    %58 = vset.pattern.permute.xlu0 2
    %59 = vperm.xlu0 %58, %v41
    %v60 = vpop.permute.xlu0 %59
    %vm61 = vcmp.eq.s32.totalorder %v60, %v43
    %v62 = vsel %vm61, 1, 0
    %v63 = vcvt.s32.f32 %v62
    %v64 = vadd.f32 %v57, %v63
    %65 = vset.pattern.permute.xlu0 3
    %66 = vperm.xlu0 %65, %v41
    %v67 = vpop.permute.xlu0 %66
    %vm68 = vcmp.eq.s32.totalorder %v67, %v43
    %v69 = vsel %vm68, 1, 0
    %v70 = vcvt.s32.f32 %v69
    %v71 = vadd.f32 %v64, %v70
    %72 = vset.pattern.permute.xlu0 4
    %73 = vperm.xlu0 %72, %v41
    %v74 = vpop.permute.xlu0 %73
    %vm75 = vcmp.eq.s32.totalorder %v74, %v43
    %v76 = vsel %vm75, 1, 0
    %v77 = vcvt.s32.f32 %v76
    %v78 = vadd.f32 %v71, %v77
    %79 = vset.pattern.permute.xlu0 5
    %80 = vperm.xlu0 %79, %v41
    %v81 = vpop.permute.xlu0 %80
    %vm82 = vcmp.eq.s32.totalorder %v81, %v43
    %v83 = vsel %vm82, 1, 0
    %v84 = vcvt.s32.f32 %v83
    %v85 = vadd.f32 %v78, %v84
    %86 = vset.pattern.permute.xlu0 6
    %87 = vperm.xlu0 %86, %v41
    %v88 = vpop.permute.xlu0 %87
    %vm89 = vcmp.eq.s32.totalorder %v88, %v43
    %v90 = vsel %vm89, 1, 0
    %v91 = vcvt.s32.f32 %v90
    %v92 = vadd.f32 %v85, %v91
    %93 = vset.pattern.permute.xlu0 7
    %94 = vperm.xlu0 %93, %v41
    %v95 = vpop.permute.xlu0 %94
    %vm96 = vcmp.eq.s32.totalorder %v95, %v43
    %v97 = vsel %vm96, 1, 0
    %v98 = vcvt.s32.f32 %v97
    %v99 = vadd.f32 %v92, %v98
    %v100 = vld [vmem:[#allocation5] sm:$0xff]
    %v101 = vld [vmem:[#allocation5 + $0x8] sm:$0xff]
    %v102 = vld [vmem:[#allocation5 + $0x10] sm:$0xff]
    %v103 = vld [vmem:[#allocation5 + $0x18] sm:$0xff]
    %v104 = vld [vmem:[#allocation5 + $0x20] sm:$0xff]
    %v105 = vld [vmem:[#allocation5 + $0x28] sm:$0xff]
    %v106 = vld [vmem:[#allocation5 + $0x30] sm:$0xff]
    %v107 = vld [vmem:[#allocation5 + $0x38] sm:$0xff]
    %v108 = vld [vmem:[#allocation5 + $0x40] sm:$0xff]
    %v109 = vld [vmem:[#allocation5 + $0x48] sm:$0xff]
    %v110 = vld [vmem:[#allocation5 + $0x50] sm:$0xff]
    %v111 = vld [vmem:[#allocation5 + $0x58] sm:$0xff]
    %v112 = vld [vmem:[#allocation5 + $0x60] sm:$0xff]
    %v113 = vld [vmem:[#allocation5 + $0x68] sm:$0xff]
    %v114 = vld [vmem:[#allocation5 + $0x70] sm:$0xff]
    %v115 = vld [vmem:[#allocation5 + $0x78] sm:$0xff]
    %v116 = vld [vmem:[%s2] sm:$0x1]
    %v118 = vlaneseq
    %v119 = vshrl.u32 %v118, 7
    %v120 = vsub.s32 0, %v119
    %v121 = vrot.slane %v116, %v120
    %123 = vmatprep.subr.mxu0 0.0
    %124 = vmatpush1.msra.mxu0 %v100
    %125 = vmatprep.subr.mxu0 0.0
    %126 = vmatpush1.msra.mxu0 %v101
    %127 = vmatprep.subr.mxu0 0.0
    %128 = vmatpush1.msra.mxu0 %v102
    %129 = vmatprep.subr.mxu0 0.0
    %130 = vmatpush1.msra.mxu0 %v103
    %131 = vmatprep.subr.mxu0 0.0
    %132 = vmatpush1.msra.mxu0 %v104
    %133 = vmatprep.subr.mxu0 0.0
    %134 = vmatpush1.msra.mxu0 %v105
    %135 = vmatprep.subr.mxu0 0.0
    %136 = vmatpush1.msra.mxu0 %v106
    %137 = vmatprep.subr.mxu0 0.0
    %138 = vmatpush1.msra.mxu0 %v107
    %139 = vmatprep.subr.mxu0 0.0
    %140 = vmatpush1.msra.mxu0 %v108
    %141 = vmatprep.subr.mxu0 0.0
    %142 = vmatpush1.msra.mxu0 %v109
    %143 = vmatprep.subr.mxu0 0.0
    %144 = vmatpush1.msra.mxu0 %v110
    %145 = vmatprep.subr.mxu0 0.0
    %146 = vmatpush1.msra.mxu0 %v111
    %147 = vmatprep.subr.mxu0 0.0
    %148 = vmatpush1.msra.mxu0 %v112
    %149 = vmatprep.subr.mxu0 0.0
    %150 = vmatpush1.msra.mxu0 %v113
    %151 = vmatprep.subr.mxu0 0.0
    %152 = vmatpush1.msra.mxu0 %v114
    %153 = vmatprep.subr.mxu0 0.0
    %154 = vmatpush1.msra.mxu0 %v115
    %155 = vmatprep.subr.mxu0 0.0
    %156 = vmatpush1.msra.mxu0 0.0
    %157 = vmatprep.subr.mxu0 0.0
    %158 = vmatpush1.msra.mxu0 0.0
    %159 = vmatprep.subr.mxu0 0.0
    %160 = vmatpush1.msra.mxu0 0.0
    %161 = vmatprep.subr.mxu0 0.0
    %162 = vmatpush1.msra.mxu0 0.0
    %163 = vmatprep.subr.mxu0 0.0
    %164 = vmatpush1.msra.mxu0 0.0
    %165 = vmatprep.subr.mxu0 0.0
    %166 = vmatpush1.msra.mxu0 0.0
    %167 = vmatprep.subr.mxu0 0.0
    %168 = vmatpush1.msra.mxu0 0.0
    %169 = vmatprep.subr.mxu0 0.0
    %170 = vmatpush1.msra.mxu0 0.0
    %171 = vmatprep.subr.mxu0 0.0
    %172 = vmatpush1.msra.mxu0 0.0
    %173 = vmatprep.subr.mxu0 0.0
    %174 = vmatpush1.msra.mxu0 0.0
    %175 = vmatprep.subr.mxu0 0.0
    %176 = vmatpush1.msra.mxu0 0.0
    %177 = vmatprep.subr.mxu0 0.0
    %178 = vmatpush1.msra.mxu0 0.0
    %179 = vmatprep.subr.mxu0 0.0
    %180 = vmatpush1.msra.mxu0 0.0
    %181 = vmatprep.subr.mxu0 0.0
    %182 = vmatpush1.msra.mxu0 0.0
    %183 = vmatprep.subr.mxu0 0.0
    %184 = vmatpush1.msra.mxu0 0.0
    %185 = vmatprep.subr.mxu0 0.0
    %186 = vmatpush1.msra.mxu0 0.0
    %187 = vmatprep.mubr.f32.mxu0 0.0
    %188 = vmatmul.mubr.f32.gmra.mrb[0].mxu0 %v99
    %v189 = vpop.f32.mrb[0].mxu0
    %v190 = vadd.f32 %v121, %v189
    %v191 = vpop.f32.mrb[0].mxu0
    %192 = vdwg.mxu0
    %193 = vst [vmem:[#allocation7] sm:$0xff] %v190
    // Predicated region
    $region22: #{tpu_custom_call.1} parent=1 // pred_check
      _
    $region23: #{tpu_custom_call.1} parent=1 // pred_check_branch
      %195 = sbr.rel (0) target = $region25
    $region24: #{tpu_custom_call.1} parent=1 // pred_region
      %s197 = ssub.s32 128, 128
      %198 = vsyncadd [#allocation4], %s197
      %s200 = sshll.u32 [#allocation7], 4
      %s201 = int_to_ptr.vmem [resolvable:$true] %s200
      %203 = dma.vmem_to_hbm [thread:$0]  %s201, 128, %s3, [#allocation4]
    $region25: #{tpu_custom_call.1} parent=1 // pred_fallthru
      _
    // Predicated region
    $region26: #{tpu_custom_call.1} parent=1 // pred_check
      _
    $region27: #{tpu_custom_call.1} parent=1 // pred_check_branch
      %205 = sbr.rel (0) target = $region29
    $region28: #{tpu_custom_call.1} parent=1 // pred_region
      %206 = dma.done [#allocation4], 128
    $region29: #{tpu_custom_call.1} parent=1 // pred_fallthru
      _
    %207 = vsyncpa [#allocation3], 1
    %208 = vsyncpa [#allocation6], 1
    %209 = vsyncpa [#allocation4], 1

</llo_original>
